<compile_context>
chip_gen: v7x
topology: tpu7x:2x2x1
jax: 0.10.0
libtpu: 0.0.40
codegen_flags: <defaults>
</compile_context>

<pallas_src>
import jax
import jax.numpy as jnp
from jax.experimental import pallas as pl
from jax.experimental.pallas import tpu as pltpu


def _round_up(n: int, m: int) -> int:
    return ((n + m - 1) // m) * m


def projection_head_kernel(x_ref, w1_ref, w2_ref, o_ref):
    # Cast activations to the matmul compute dtype inside the kernel (VPU has
    # slack vs. DMA/MXU); keeps HBM traffic to a single f32 read of x.
    x = x_ref[...].astype(w1_ref.dtype)
    # hidden = relu(x @ W1)   -- bf16 MXU matmul, f32 accumulation
    h = jnp.dot(x, w1_ref[...], preferred_element_type=jnp.float32)
    h = jnp.maximum(h, 0.0)
    # y = h @ W2              -- downcast hidden to bf16 for the second MXU pass
    y = jnp.dot(h.astype(w2_ref.dtype), w2_ref[...],
                preferred_element_type=jnp.float32)
    # L2 normalize along the feature dim (torch F.normalize, eps=1e-12):
    #   y / max(||y||, eps) == y * rsqrt(max(sum(y^2), eps^2))
    sumsq = jnp.sum(y * y, axis=-1, keepdims=True)
    inv = jax.lax.rsqrt(jnp.maximum(sumsq, 1e-24))
    o_ref[...] = (y * inv).astype(o_ref.dtype)


def prepare_params(w_hidden, w_fc, compute_dtype=jnp.bfloat16):
    """One-time weight prep: transpose to (in, out), zero-pad the OUTPUT
    feature dims up to 128 lanes, cast to the matmul compute dtype.  The K
    (input-feature) dim of W1 is left at the true E so it always matches the
    unpadded x block.  Call once; reuse across projection_head calls."""
    P, E = w_hidden.shape
    assert w_fc.shape == (P, P)
    P_pad = _round_up(P, 128)
    w1 = jnp.zeros((E, P_pad), compute_dtype)
    w1 = w1.at[:, :P].set(jnp.asarray(w_hidden).T.astype(compute_dtype))
    w2 = jnp.zeros((P_pad, P_pad), compute_dtype)
    w2 = w2.at[:P, :P].set(jnp.asarray(w_fc).T.astype(compute_dtype))
    return w1, w2


def projection_head(x, w1p, w2p, out_features, *, tb=512,
                    out_dtype=jnp.bfloat16):
    """x: [B, E] (any float dtype); w1p: [E, P_pad]; w2p: [P_pad, P_pad]
    (both from prepare_params).  Returns [B, out_features] in out_dtype."""
    B, E = x.shape
    E_w, P_pad = w1p.shape
    assert E_w == E, (E_w, E)
    assert w2p.shape == (P_pad, P_pad)
    assert out_features <= P_pad

    # Batch tile: multiple of 8 sublanes, >=2 grid steps when B allows it so
    # the "parallel" axis can shard across v7x's two TensorCores, and never
    # larger than the (rounded-up) batch.
    tb = max(8, _round_up(tb, 8))
    tb = min(tb, max(8, _round_up((B + 1) // 2, 8)))
    tb = min(tb, _round_up(B, 8))
    grid_b = pl.cdiv(B, tb)

    # Scoped-VMEM budget from the actual buffers (+25% headroom):
    #   x tiles double-buffered, weights single-buffered, out tiles
    #   double-buffered, plus f32/bf16 intermediates (h, h_bf16, y, x_bf16).
    x_bytes = jnp.dtype(x.dtype).itemsize
    w_bytes = jnp.dtype(w1p.dtype).itemsize
    o_bytes = jnp.dtype(out_dtype).itemsize
    est = (2 * tb * E * x_bytes
           + (E * P_pad + P_pad * P_pad) * w_bytes
           + 2 * tb * P_pad * o_bytes
           + 12 * tb * P_pad + 2 * tb * E)
    vmem_limit = min(max(int(est * 1.25) + (2 << 20), 32 << 20), 64 << 20)

    out = pl.pallas_call(
        projection_head_kernel,
        out_shape=jax.ShapeDtypeStruct((B, P_pad), out_dtype),
        grid_spec=pltpu.PrefetchScalarGridSpec(
            num_scalar_prefetch=0,
            grid=(grid_b,),
            in_specs=[
                # x row tile; last dim is the full E extent (no K padding
                # needed, no OOB-K hazard).
                pl.BlockSpec((tb, E), lambda i: (i, 0)),
                # Grid-invariant weights: single-buffered (constant index_map,
                # double-buffering would only burn VMEM).
                pl.BlockSpec((E, P_pad), lambda i: (0, 0),
                             pipeline_mode=pl.Buffered(1)),
                pl.BlockSpec((P_pad, P_pad), lambda i: (0, 0),
                             pipeline_mode=pl.Buffered(1)),
            ],
            out_specs=pl.BlockSpec((tb, P_pad), lambda i: (i, 0)),
        ),
        compiler_params=pltpu.CompilerParams(
            dimension_semantics=("parallel",),
            vmem_limit_bytes=vmem_limit,
        ),
    )(x, w1p, w2p)

    if out_features == P_pad:
        return out  # fast path: lane-dense output, no post-kernel slice copy
    return out[:, :out_features]


def projection_head_ref(x, w_hidden, w_fc):
    h = jnp.maximum(x @ w_hidden.T, 0.0)
    y = h @ w_fc.T
    norm = jnp.sqrt(jnp.sum(y * y, axis=1, keepdims=True))
    return y / jnp.maximum(norm, 1e-12)


if __name__ == "__main__":
    key = jax.random.PRNGKey(0)
    k_x, k_w1, k_w2 = jax.random.split(key, 3)

    B = 8                     # batch
    in_embedding_size = 32    # E
    projection_size = 32      # P

    x = jax.random.normal(k_x, (B, in_embedding_size), dtype=jnp.float32)
    # nn.Linear weight shapes: (out_features, in_features), bias=False
    w_hidden = jax.random.normal(
        k_w1, (projection_size, in_embedding_size), dtype=jnp.float32) * 0.1
    w_fc = jax.random.normal(
        k_w2, (projection_size, projection_size), dtype=jnp.float32) * 0.1

    # One-time weight preparation (transpose + pad output dims + bf16 cast).
    w1p, w2p = prepare_params(w_hidden, w_fc)

    out = projection_head(x, w1p, w2p, out_features=projection_size)
    out = jax.block_until_ready(out)

    ref = projection_head_ref(x, w_hidden, w_fc)
    assert out.shape == (B, projection_size)
    # bf16 matmuls (f32 accumulation) + bf16 output vs. pure-f32 reference.
    assert jnp.allclose(out.astype(jnp.float32), ref, atol=3e-2, rtol=3e-2), \
        float(jnp.max(jnp.abs(out.astype(jnp.float32) - ref)))
    # Rows must be (bf16-rounded) unit-norm; normalization is done in f32.
    row_norms = jnp.sqrt(jnp.sum(out.astype(jnp.float32) ** 2, axis=1))
    assert jnp.allclose(row_norms, 1.0, atol=1e-2)

    print("KERNEL_OK")
</pallas_src>

<mosaic_0001>
module attributes {stable_mosaic.version = 11 : i64} {
  func.func @projection_head_kernel(%arg0: i32, %arg1: memref<8x32xf32, #tpu.memory_space<vmem>>, %arg2: memref<32x128xbf16, #tpu.memory_space<vmem>>, %arg3: memref<128x128xbf16, #tpu.memory_space<vmem>>, %arg4: memref<8x128xbf16, #tpu.memory_space<vmem>>) attributes {dimension_semantics = [#tpu.dimension_semantics<parallel>], iteration_bounds = array<i64: 1>, scalar_prefetch = 0 : i64, scratch_operands = 0 : i64, tpu.core_type = #tpu.core_type<tc>, window_params = [{transform_indices = @transform_0, window_bounds = array<i64: 8, 32>}, {pipeline_mode = #tpu.pipeline_mode<synchronous>, transform_indices = @transform_1, window_bounds = array<i64: 32, 128>}, {pipeline_mode = #tpu.pipeline_mode<synchronous>, transform_indices = @transform_2, window_bounds = array<i64: 128, 128>}, {transform_indices = @transform_3, window_bounds = array<i64: 8, 128>}]} {
    %c0 = arith.constant 0 : index
    %c0_0 = arith.constant 0 : index
    %0 = vector.load %arg1[%c0, %c0_0] : memref<8x32xf32, #tpu.memory_space<vmem>>, vector<8x32xf32>
    %1 = arith.truncf %0 : vector<8x32xf32> to vector<8x32xbf16>
    %c0_1 = arith.constant 0 : index
    %c0_2 = arith.constant 0 : index
    %2 = vector.load %arg2[%c0_1, %c0_2] : memref<32x128xbf16, #tpu.memory_space<vmem>>, vector<32x128xbf16>
    %cst = arith.constant dense<0.000000e+00> : vector<8x128xf32>
    %3 = tpu.matmul %1, %2, %cst {dimension_numbers = #tpu.dot_dimension_numbers<[1], [0], [0], [1], [0, 0, 1, 1], [], []>} : vector<8x32xbf16>, vector<32x128xbf16>, vector<8x128xf32> -> vector<8x128xf32>
    %cst_3 = arith.constant 0.000000e+00 : f32
    %4 = vector.broadcast %cst_3 : f32 to vector<8x128xf32>
    %5 = arith.maximumf %3, %4 : vector<8x128xf32>
    %6 = arith.truncf %5 : vector<8x128xf32> to vector<8x128xbf16>
    %c0_4 = arith.constant 0 : index
    %c0_5 = arith.constant 0 : index
    %7 = vector.load %arg3[%c0_4, %c0_5] : memref<128x128xbf16, #tpu.memory_space<vmem>>, vector<128x128xbf16>
    %cst_6 = arith.constant dense<0.000000e+00> : vector<8x128xf32>
    %8 = tpu.matmul %6, %7, %cst_6 {dimension_numbers = #tpu.dot_dimension_numbers<[1], [0], [0], [1], [0, 0, 1, 1], [], []>} : vector<8x128xbf16>, vector<128x128xbf16>, vector<8x128xf32> -> vector<8x128xf32>
    %9 = arith.mulf %8, %8 : vector<8x128xf32>
    %cst_7 = arith.constant dense<0.000000e+00> : vector<8xf32>
    %10 = vector.multi_reduction <add>, %9, %cst_7 [1] : vector<8x128xf32> to vector<8xf32>
    %11 = vector.shape_cast %10 : vector<8xf32> to vector<8x1xf32>
    %cst_8 = arith.constant 1.000000e-24 : f32
    %12 = vector.broadcast %cst_8 : f32 to vector<8x1xf32>
    %13 = arith.maximumf %11, %12 : vector<8x1xf32>
    %14 = math.rsqrt %13 : vector<8x1xf32>
    %15 = vector.broadcast %14 : vector<8x1xf32> to vector<8x128xf32>
    %16 = arith.mulf %8, %15 : vector<8x128xf32>
    %17 = arith.truncf %16 : vector<8x128xf32> to vector<8x128xbf16>
    %c0_9 = arith.constant 0 : index
    %c0_10 = arith.constant 0 : index
    %18 = vector.load %arg4[%c0_9, %c0_10] : memref<8x128xbf16, #tpu.memory_space<vmem>>, vector<8x128xbf16>
    tpu.vector_store %arg4[%c0_9, %c0_10], %17 {strides = array<i32>} : memref<8x128xbf16, #tpu.memory_space<vmem>>, vector<8x128xbf16>,
    return
  }
  func.func @transform_0(%arg0: i32) -> (i32, i32) {
    %c0_i32 = arith.constant 0 : i32
    %c0_i32_0 = arith.constant 0 : i32
    return %arg0, %c0_i32 : i32, i32
  }
  func.func @transform_1(%arg0: i32) -> (i32, i32) {
    %c0_i32 = arith.constant 0 : i32
    %c0_i32_0 = arith.constant 0 : i32
    %c0_i32_1 = arith.constant 0 : i32
    return %c0_i32, %c0_i32_0 : i32, i32
  }
  func.func @transform_2(%arg0: i32) -> (i32, i32) {
    %c0_i32 = arith.constant 0 : i32
    %c0_i32_0 = arith.constant 0 : i32
    %c0_i32_1 = arith.constant 0 : i32
    return %c0_i32, %c0_i32_0 : i32, i32
  }
  func.func @transform_3(%arg0: i32) -> (i32, i32) {
    %c0_i32 = arith.constant 0 : i32
    %c0_i32_0 = arith.constant 0 : i32
    return %arg0, %c0_i32 : i32, i32
  }
}

</mosaic_0001>

<llo_original>
// kernel: tpu_custom_call.1
$region0: #{tpu_custom_call.1}
  #allocation0 [shape = 'u32[]', space=smem, size = 0x4, offset = 0x4, fixed_abs, tag = 'smem constant byte address 0x4 - core index']
  #allocation1 [shape = 'u32[144,128]{1,0:T(1,128)}', space=vmem, size = 0x12000, scoped, tag = 'internal scratch']
  %s0 = inlined_call_operand.hbm [shape: f32[8,32], index: 0, kind: input, shape index: {}]
  %s1 = inlined_call_operand.hbm [shape: bf16[32,128], index: 1, kind: input, shape index: {}]
  %s2 = inlined_call_operand.hbm [shape: bf16[128,128], index: 2, kind: input, shape index: {}]
  %s3 = inlined_call_operand.hbm [shape: bf16[8,128], index: 3, kind: output, shape index: {}]
  %s4 = sld [smem:[#allocation0]]
  $region34: #{tpu_custom_call.1} parent=0
    _
  %s6 = ssub.s32 1, %s4
  %s7 = scalar_select 0, %s6, %s4
  $region1: #{tpu_custom_call.1} parent=0
    #allocation2 [shape = 'u8[4096]{0}', space=vmem, size = 0x1000, scoped, tag = 'input window, operand 0, single buffered']
    #allocation3 [shape = 's32[1]{0}', space=sflag, size = 0x4, scoped, tag = 'scoped memory for tpu_custom_call.1']
    #allocation4 [shape = 's32[1]{0}', space=sflag, size = 0x4, scoped, tag = 'scoped memory for tpu_custom_call.1']
    #allocation5 [shape = 'u8[8192]{0}', space=vmem, size = 0x2000, scoped, tag = 'input window, operand 1, single buffered']
    #allocation6 [shape = 's32[1]{0}', space=sflag, size = 0x4, scoped, tag = 'scoped memory for tpu_custom_call.1']
    #allocation7 [shape = 'u8[32768]{0}', space=vmem, size = 0x8000, scoped, tag = 'input window, operand 2, single buffered']
    #allocation8 [shape = 'u8[2048]{0}', space=vmem, size = 0x800, scoped, tag = 'output window, operand 0, single buffered']
    %8 = vsyncpa [#allocation3], 0
    %9 = vsyncpa [#allocation6], 0
    %10 = vsyncpa [#allocation4], 0
    // Predicated region
    $region2: #{tpu_custom_call.1} parent=1 // pred_check
      _
    $region3: #{tpu_custom_call.1} parent=1 // pred_check_branch
      %12 = sbr.rel (0) target = $region5
    $region4: #{tpu_custom_call.1} parent=1 // pred_region
      %s14 = ssub.s32 128, 128
      %15 = vsyncadd [#allocation3], %s14
      %s17 = sshll.u32 [#allocation2], 4
      %s18 = int_to_ptr.vmem [resolvable:$true] %s17
      %20 = dma.hbm_to_vmem [thread:$0]  %s0, 128, %s18, [#allocation3]
    $region5: #{tpu_custom_call.1} parent=1 // pred_fallthru
      _
    // Predicated region
    $region6: #{tpu_custom_call.1} parent=1 // pred_check
      _
    $region7: #{tpu_custom_call.1} parent=1 // pred_check_branch
      %22 = sbr.rel (0) target = $region9
    $region8: #{tpu_custom_call.1} parent=1 // pred_region
      %s24 = ssub.s32 256, 256
      %25 = vsyncadd [#allocation6], %s24
      %s26 = sshll.u32 [#allocation5], 4
      %s27 = int_to_ptr.vmem [resolvable:$true] %s26
      %32 = dma.hbm_to_vmem [thread:$0]  %s1, 256, %s27, [#allocation6], 64, 64, 4
    $region9: #{tpu_custom_call.1} parent=1 // pred_fallthru
      _
    // Predicated region
    $region10: #{tpu_custom_call.1} parent=1 // pred_check
      _
    $region11: #{tpu_custom_call.1} parent=1 // pred_check_branch
      %34 = sbr.rel (0) target = $region13
    $region12: #{tpu_custom_call.1} parent=1 // pred_region
      %s36 = ssub.s32 1024, 1024
      %37 = vsyncadd [#allocation6], %s36
      %s38 = sshll.u32 [#allocation7], 4
      %s39 = int_to_ptr.vmem [resolvable:$true] %s38
      %44 = dma.hbm_to_vmem [thread:$0]  %s2, 1024, %s39, [#allocation6], 64, 64, 4
    $region13: #{tpu_custom_call.1} parent=1 // pred_fallthru
      _
    // Predicated region
    $region14: #{tpu_custom_call.1} parent=1 // pred_check
      _
    $region15: #{tpu_custom_call.1} parent=1 // pred_check_branch
      %46 = sbr.rel (0) target = $region17
    $region16: #{tpu_custom_call.1} parent=1 // pred_region
      %47 = dma.done [#allocation3], 128
    $region17: #{tpu_custom_call.1} parent=1 // pred_fallthru
      _
    // Predicated region
    $region18: #{tpu_custom_call.1} parent=1 // pred_check
      _
    $region19: #{tpu_custom_call.1} parent=1 // pred_check_branch
      %49 = sbr.rel (0) target = $region21
    $region20: #{tpu_custom_call.1} parent=1 // pred_region
      %50 = dma.done [#allocation6], 256
    $region21: #{tpu_custom_call.1} parent=1 // pred_fallthru
      _
    // Predicated region
    $region22: #{tpu_custom_call.1} parent=1 // pred_check
      _
    $region23: #{tpu_custom_call.1} parent=1 // pred_check_branch
      %52 = sbr.rel (0) target = $region25
    $region24: #{tpu_custom_call.1} parent=1 // pred_region
      %53 = dma.done [#allocation6], 1024
    $region25: #{tpu_custom_call.1} parent=1 // pred_fallthru
      _
    %v55 = vld [vmem:[#allocation2] sm:$0xff]
    %v56 = vpack.c.bf16 %v55, %v55
    %v57 = vld [vmem:[#allocation5] sm:$0xf]
    %v58 = vld [vmem:[#allocation5 + $0x4] sm:$0xf]
    %v59 = vld [vmem:[#allocation5 + $0x8] sm:$0xf]
    %v60 = vld [vmem:[#allocation5 + $0xc] sm:$0xf]
    %v65 = vunpack.c.l.b16 %v57
    %v66 = vunpack.c.l.b16 %v58
    %v67 = vunpack.c.l.b16 %v59
    %v68 = vunpack.c.l.b16 %v60
    %v69 = vpack.c.b16 %v66, %v65
    %v70 = vpack.c.b16 %v68, %v67
    %vm73 = vcmask 261120
    %v75 = vsel %vm73, %v56, 0
    %77 = vmatprep.subr.bf16.mxu0 0
    %78 = vmatpush1.bf16.msra.mxu0 %v69
    %79 = vmatprep.subr.bf16.mxu0 0
    %80 = vmatpush1.bf16.msra.mxu0 %v70
    %81 = vmatprep.subr.bf16.mxu0 0
    %82 = vmatpush1.bf16.msra.mxu0 0
    %83 = vmatprep.subr.bf16.mxu0 0
    %84 = vmatpush1.bf16.msra.mxu0 0
    %85 = vmatprep.subr.bf16.mxu0 0
    %86 = vmatpush1.bf16.msra.mxu0 0
    %87 = vmatprep.subr.bf16.mxu0 0
    %88 = vmatpush1.bf16.msra.mxu0 0
    %89 = vmatprep.subr.bf16.mxu0 0
    %90 = vmatpush1.bf16.msra.mxu0 0
    %91 = vmatprep.subr.bf16.mxu0 0
    %92 = vmatpush1.bf16.msra.mxu0 0
    %93 = vmatprep.subr.bf16.mxu0 0
    %94 = vmatpush1.bf16.msra.mxu0 0
    %95 = vmatprep.subr.bf16.mxu0 0
    %96 = vmatpush1.bf16.msra.mxu0 0
    %97 = vmatprep.subr.bf16.mxu0 0
    %98 = vmatpush1.bf16.msra.mxu0 0
    %99 = vmatprep.subr.bf16.mxu0 0
    %100 = vmatpush1.bf16.msra.mxu0 0
    %101 = vmatprep.subr.bf16.mxu0 0
    %102 = vmatpush1.bf16.msra.mxu0 0
    %103 = vmatprep.subr.bf16.mxu0 0
    %104 = vmatpush1.bf16.msra.mxu0 0
    %105 = vmatprep.subr.bf16.mxu0 0
    %106 = vmatpush1.bf16.msra.mxu0 0
    %107 = vmatprep.subr.bf16.mxu0 0
    %108 = vmatpush1.bf16.msra.mxu0 0
    %109 = vmatprep.mubr.bf16.mxu0 0
    %110 = vmatmul.mubr.bf16.gmra.mrb[0].mxu0 %v75
    %v111 = vpop.f32.mrb[0].mxu0
    %v112 = vadd.f32 0.0, %v111
    %v113 = vpop.f32.mrb[0].mxu0
    %v114 = vpop.f32.mrb[0].mxu0
    %v115 = vpop.f32.mrb[0].mxu0
    %116 = vdwg.mxu0
    %v117 = vmax.f32 %v112, 0.0
    %v118 = vpack.c.bf16 %v117, %v117
    %v119 = vld [vmem:[#allocation7] sm:$0xf]
    %v120 = vld [vmem:[#allocation7 + $0x4] sm:$0xf]
    %v121 = vld [vmem:[#allocation7 + $0x8] sm:$0xf]
    %v122 = vld [vmem:[#allocation7 + $0xc] sm:$0xf]
    %v123 = vld [vmem:[#allocation7 + $0x10] sm:$0xf]
    %v124 = vld [vmem:[#allocation7 + $0x14] sm:$0xf]
    %v125 = vld [vmem:[#allocation7 + $0x18] sm:$0xf]
    %v126 = vld [vmem:[#allocation7 + $0x1c] sm:$0xf]
    %v127 = vld [vmem:[#allocation7 + $0x20] sm:$0xf]
    %v128 = vld [vmem:[#allocation7 + $0x24] sm:$0xf]
    %v129 = vld [vmem:[#allocation7 + $0x28] sm:$0xf]
    %v130 = vld [vmem:[#allocation7 + $0x2c] sm:$0xf]
    %v131 = vld [vmem:[#allocation7 + $0x30] sm:$0xf]
    %v132 = vld [vmem:[#allocation7 + $0x34] sm:$0xf]
    %v133 = vld [vmem:[#allocation7 + $0x38] sm:$0xf]
    %v134 = vld [vmem:[#allocation7 + $0x3c] sm:$0xf]
    %v151 = vunpack.c.l.b16 %v119
    %v152 = vunpack.c.l.b16 %v120
    %v153 = vunpack.c.l.b16 %v121
    %v154 = vunpack.c.l.b16 %v122
    %v155 = vunpack.c.l.b16 %v123
    %v156 = vunpack.c.l.b16 %v124
    %v157 = vunpack.c.l.b16 %v125
    %v158 = vunpack.c.l.b16 %v126
    %v159 = vunpack.c.l.b16 %v127
    %v160 = vunpack.c.l.b16 %v128
    %v161 = vunpack.c.l.b16 %v129
    %v162 = vunpack.c.l.b16 %v130
    %v163 = vunpack.c.l.b16 %v131
    %v164 = vunpack.c.l.b16 %v132
    %v165 = vunpack.c.l.b16 %v133
    %v166 = vunpack.c.l.b16 %v134
    %v167 = vpack.c.b16 %v152, %v151
    %v168 = vpack.c.b16 %v154, %v153
    %v169 = vpack.c.b16 %v156, %v155
    %v170 = vpack.c.b16 %v158, %v157
    %v171 = vpack.c.b16 %v160, %v159
    %v172 = vpack.c.b16 %v162, %v161
    %v173 = vpack.c.b16 %v164, %v163
    %v174 = vpack.c.b16 %v166, %v165
    %183 = vmatprep.subr.bf16.mxu0 0
    %184 = vmatpush1.bf16.msra.mxu0 %v167
    %185 = vmatprep.subr.bf16.mxu0 0
    %186 = vmatpush1.bf16.msra.mxu0 %v168
    %187 = vmatprep.subr.bf16.mxu0 0
    %188 = vmatpush1.bf16.msra.mxu0 %v169
    %189 = vmatprep.subr.bf16.mxu0 0
    %190 = vmatpush1.bf16.msra.mxu0 %v170
    %191 = vmatprep.subr.bf16.mxu0 0
    %192 = vmatpush1.bf16.msra.mxu0 %v171
    %193 = vmatprep.subr.bf16.mxu0 0
    %194 = vmatpush1.bf16.msra.mxu0 %v172
    %195 = vmatprep.subr.bf16.mxu0 0
    %196 = vmatpush1.bf16.msra.mxu0 %v173
    %197 = vmatprep.subr.bf16.mxu0 0
    %198 = vmatpush1.bf16.msra.mxu0 %v174
    %199 = vmatprep.subr.bf16.mxu0 0
    %200 = vmatpush1.bf16.msra.mxu0 0
    %201 = vmatprep.subr.bf16.mxu0 0
    %202 = vmatpush1.bf16.msra.mxu0 0
    %203 = vmatprep.subr.bf16.mxu0 0
    %204 = vmatpush1.bf16.msra.mxu0 0
    %205 = vmatprep.subr.bf16.mxu0 0
    %206 = vmatpush1.bf16.msra.mxu0 0
    %207 = vmatprep.subr.bf16.mxu0 0
    %208 = vmatpush1.bf16.msra.mxu0 0
    %209 = vmatprep.subr.bf16.mxu0 0
    %210 = vmatpush1.bf16.msra.mxu0 0
    %211 = vmatprep.subr.bf16.mxu0 0
    %212 = vmatpush1.bf16.msra.mxu0 0
    %213 = vmatprep.subr.bf16.mxu0 0
    %214 = vmatpush1.bf16.msra.mxu0 0
    %215 = vmatprep.mubr.bf16.mxu0 0
    %216 = vmatmul.mubr.bf16.gmra.mrb[0].mxu0 %v118
    %v217 = vpop.f32.mrb[0].mxu0
    %v218 = vadd.f32 0.0, %v217
    %v219 = vpop.f32.mrb[0].mxu0
    %v220 = vpop.f32.mrb[0].mxu0
    %v221 = vpop.f32.mrb[0].mxu0
    %222 = vdwg.mxu0
    %v223 = vmul.f32 %v218, %v218
    %224 = vadd.xlane.f32.xlu0 %v223
    %v225 = vpop.xlane.xlu0 %224
    %v226 = vmax.f32 %v225, 1e-24
    %v227 = vrsqrt.pop %v226
    %v228 = vmul.f32 %v218, %v227
    %v229 = vpack.c.bf16 %v228, %v228
    %230 = vst [vmem:[#allocation8] sm:$0xf] %v229
    // Predicated region
    $region26: #{tpu_custom_call.1} parent=1 // pred_check
      _
    $region27: #{tpu_custom_call.1} parent=1 // pred_check_branch
      %232 = sbr.rel (0) target = $region29
    $region28: #{tpu_custom_call.1} parent=1 // pred_region
      %s234 = ssub.s32 64, 64
      %235 = vsyncadd [#allocation4], %s234
      %s237 = sshll.u32 [#allocation8], 4
      %s238 = int_to_ptr.vmem [resolvable:$true] %s237
      %240 = dma.vmem_to_hbm [thread:$0]  %s238, 64, %s3, [#allocation4]
    $region29: #{tpu_custom_call.1} parent=1 // pred_fallthru
      _
    // Predicated region
    $region30: #{tpu_custom_call.1} parent=1 // pred_check
      _
    $region31: #{tpu_custom_call.1} parent=1 // pred_check_branch
      %242 = sbr.rel (0) target = $region33
    $region32: #{tpu_custom_call.1} parent=1 // pred_region
      %243 = dma.done [#allocation4], 64
    $region33: #{tpu_custom_call.1} parent=1 // pred_fallthru
      _
    %244 = vsyncpa [#allocation3], 1
    %245 = vsyncpa [#allocation6], 1
    %246 = vsyncpa [#allocation4], 1

</llo_original>
